<compile_context>
chip_gen: v7x
topology: tpu7x:2x2x1
jax: 0.10.0
libtpu: 0.0.40
codegen_flags: <defaults>
</compile_context>

<pallas_src>
import jax
import jax.numpy as jnp
from jax.experimental import pallas as pl
from jax.experimental.pallas import tpu as pltpu


# ---------------------------------------------------------------------------
# Pallas kernels
# ---------------------------------------------------------------------------

def _spectral_mix_kernel(x_ref, w_ref, o_ref):
    # x: (1, 2C, MT), w: (2C, 2C, MT), o: (1, 2C, MT); Fourier modes on the lane axis.
    # out[o, :] = sum_i x[i, :] * w[i, o, :]  -- VPU multiply-accumulate over 2C channels.
    x = x_ref[0]                              # (2C, MT); <= ~64 KiB by tile choice
    c2 = x.shape[0]
    acc = x[0:1, :] * w_ref[0]                # (1, MT) * (2C, MT) -> (2C, MT)
    for i in range(1, c2):                    # static unroll over input channels
        acc = acc + x[i:i + 1, :] * w_ref[i]
    o_ref[0] = acc


def _pointwise_gelu_kernel(x_ref, x1_ref, w_ref, b_ref, o_ref):
    # x: (1, Cin, T), x1: (1, Cout, T), w: (Cout, Cin), b: (Cout, 1), o: (1, Cout, T)
    y = jnp.dot(w_ref[...], x_ref[0], preferred_element_type=jnp.float32) + b_ref[...]
    z = x1_ref[0] + y
    # exact (erf) GELU == torch.nn.functional.gelu default (approximate='none')
    o_ref[0] = 0.5 * z * (1.0 + jax.lax.erf(z * 0.7071067811865476))


# ---------------------------------------------------------------------------
# Tiling helpers
# ---------------------------------------------------------------------------

def _pick_mode_tile(m_total, c2):
    """Mode-tile (lane) width MT for the spectral-mix kernel.

    Keeps the live (c2, MT) f32 accumulator <= ~64 KiB (vreg pressure) and the
    double-buffered (c2, c2, MT) weight block <= ~4 MiB (safe under v5e's 16 MiB
    scoped-VMEM default).  Full-extent fallback when M is small or not a
    multiple of 128 (full-extent blocks are always legal)."""
    cap_vreg = (64 * 1024) // (4 * c2)
    cap_vmem = (4 * 1024 * 1024) // (2 * 4 * c2 * c2)
    cap = max(128, (min(cap_vreg, cap_vmem) // 128) * 128)
    if m_total <= 128 or m_total % 128 != 0:
        return m_total
    t = (min(cap, m_total) // 128) * 128
    while t >= 128:
        if m_total % t == 0:
            return t
        t -= 128
    return m_total


def _pick_hw_tile(hw, target):
    """Largest multiple-of-128 divisor of hw that is <= target, else full hw."""
    if hw <= target:
        return hw
    t = (target // 128) * 128
    while t >= 128:
        if hw % t == 0:
            return t
        t -= 128
    return hw


# ---------------------------------------------------------------------------
# Pallas wrappers
# ---------------------------------------------------------------------------

def spectral_mode_mix(x2, w2):
    """Real-stacked complex channel mixing, modes on the lane axis.

    x2: (B, 2C, M) float32, w2: (2C, 2C, M) float32  ->  (B, 2C, M) float32.
    """
    B, C2, M = x2.shape
    MT = _pick_mode_tile(M, C2)
    grid = (M // MT, B)   # weights indexed only by the mode axis -> resident across B
    return pl.pallas_call(
        _spectral_mix_kernel,
        out_shape=jax.ShapeDtypeStruct((B, C2, M), jnp.float32),
        grid=grid,
        in_specs=[pl.BlockSpec((1, C2, MT), lambda m, b: (b, 0, m)),
                  pl.BlockSpec((C2, C2, MT), lambda m, b: (0, 0, m))],
        out_specs=pl.BlockSpec((1, C2, MT), lambda m, b: (b, 0, m)),
        compiler_params=pltpu.CompilerParams(
            dimension_semantics=("parallel", "parallel")),
    )(x2, w2)


def pointwise_conv_add_gelu(x, x1, w_mat, bias):
    """gelu(x1 + w_mat @ x + b) in NCHW-native layout (HW on the lane axis).

    x, x1: (B, C, HW) float32; w_mat: (Cout, Cin); bias: (Cout,).
    Returns (B, Cout, HW) float32.
    """
    B, Cin, HW = x.shape
    Cout = w_mat.shape[0]

    # ~1 MiB of streamed data (x + x1 + out) per grid step; clamp to [512, 8192] lanes.
    bytes_per_col = (Cin + 2 * Cout) * 4
    target = max(512, min(8192, ((1 << 20) // bytes_per_col // 128) * 128))

    # VMEM guard: never fall back to a full-HW block for large HW; pad HW to a
    # multiple of 128 so a bounded, 128-multiple tile always exists.
    hw_pad = HW
    if HW > target and HW % 128 != 0:
        hw_pad = ((HW + 127) // 128) * 128
        pad = hw_pad - HW
        x = jnp.pad(x, ((0, 0), (0, 0), (0, pad)))
        x1 = jnp.pad(x1, ((0, 0), (0, 0), (0, pad)))

    T = _pick_hw_tile(hw_pad, target)
    grid = (B, hw_pad // T)
    out = pl.pallas_call(
        _pointwise_gelu_kernel,
        out_shape=jax.ShapeDtypeStruct((B, Cout, hw_pad), jnp.float32),
        grid=grid,
        in_specs=[pl.BlockSpec((1, Cin, T), lambda b, t: (b, 0, t)),
                  pl.BlockSpec((1, Cout, T), lambda b, t: (b, 0, t)),
                  pl.BlockSpec((Cout, Cin), lambda b, t: (0, 0)),
                  pl.BlockSpec((Cout, 1), lambda b, t: (0, 0))],
        out_specs=pl.BlockSpec((1, Cout, T), lambda b, t: (b, 0, t)),
        compiler_params=pltpu.CompilerParams(
            dimension_semantics=("parallel", "parallel")),
    )(x, x1, w_mat, bias.reshape(Cout, 1))
    return out[:, :, :HW] if hw_pad != HW else out


# ---------------------------------------------------------------------------
# Weight packing (hoistable out of the per-call path)
# ---------------------------------------------------------------------------

def pack_spectral_weights(weights1, weights2):
    """(Cin, Cout, m1, m2) complex x2  ->  (2Cin, 2Cout, M=2*m1*m2) float32.

    w2 = [[Wr, Wi], [-Wi, Wr]] with the mode axis last (lane axis).  For
    inference / training this can be computed once per parameter update instead
    of every forward pass."""
    cin, cout, m1, m2 = weights1.shape

    def pack(w):
        wr = jnp.real(w).reshape(cin, cout, m1 * m2).astype(jnp.float32)
        wi = jnp.imag(w).reshape(cin, cout, m1 * m2).astype(jnp.float32)
        top = jnp.concatenate([wr, wi], axis=1)      # (Cin, 2Cout, Mhalf)
        bot = jnp.concatenate([-wi, wr], axis=1)     # (Cin, 2Cout, Mhalf)
        return jnp.concatenate([top, bot], axis=0)   # (2Cin, 2Cout, Mhalf)

    return jnp.concatenate([pack(weights1), pack(weights2)], axis=-1)  # (2C, 2C, M)


# ---------------------------------------------------------------------------
# FNOBlock forward
# ---------------------------------------------------------------------------

def fno_block_forward(x, weights1, weights2, conv_w, conv_b, modes1, modes2):
    """x: (B, C, H, W) float32 (NCHW).  weights1/2: (C, C, m1, m2) complex64.
    conv_w: (C_out, C_in, 1, 1), conv_b: (C_out,)."""
    B, C, H, W = x.shape
    Wf = W // 2 + 1
    assert H >= 2 * modes1 and Wf >= modes2, "Fourier modes exceed the available spectrum"
    Mhalf = modes1 * modes2
    M = 2 * Mhalf

    # --- Spectral convolution ------------------------------------------------
    # TODO(synk): rfft2/irfft2 have no Pallas primitive; FFTs run in plain JAX (XLA).
    x_ft = jnp.fft.rfft2(x)                                   # (B, C, H, Wf) complex64

    top = x_ft[:, :, :modes1, :modes2].reshape(B, C, Mhalf)
    bot = x_ft[:, :, H - modes1:, :modes2].reshape(B, C, Mhalf)
    xm = jnp.concatenate([top, bot], axis=-1)                 # (B, C, M) complex
    x2 = jnp.concatenate([jnp.real(xm), jnp.imag(xm)], axis=1).astype(jnp.float32)  # (B, 2C, M)

    # Real-stacked weights, mode axis last (can be precomputed outside this call).
    w2 = pack_spectral_weights(weights1, weights2)            # (2C, 2C, M)

    out2 = spectral_mode_mix(x2, w2)                          # (B, 2C, M) float32
    out_c = (out2[:, :C, :] + 1j * out2[:, C:, :]).astype(jnp.complex64)  # (B, C, M)
    out_c = out_c.reshape(B, C, 2, modes1, modes2)
    top_o, bot_o = out_c[:, :, 0], out_c[:, :, 1]             # (B, C, m1, m2) each

    # Build padded spectrum by concatenation (cheaper than zeros + scatter).
    mid = jnp.zeros((B, C, H - 2 * modes1, modes2), dtype=jnp.complex64)
    left = jnp.concatenate([top_o, mid, bot_o], axis=2)       # (B, C, H, m2)
    right = jnp.zeros((B, C, H, Wf - modes2), dtype=jnp.complex64)
    out_ft = jnp.concatenate([left, right], axis=3)           # (B, C, H, Wf)

    x1 = jnp.fft.irfft2(out_ft, s=(H, W)).astype(jnp.float32)  # (B, C, H, W)

    # --- 1x1 conv + residual add + GELU (Pallas, NCHW-native, no transposes) --
    HW = H * W
    y = pointwise_conv_add_gelu(
        x.reshape(B, C, HW),
        x1.reshape(B, C, HW),
        conv_w[:, :, 0, 0].astype(jnp.float32),
        conv_b.astype(jnp.float32),
    )
    return y.reshape(B, C, H, W)


# ---------------------------------------------------------------------------
# Plain-JAX reference (mirrors the PyTorch forward exactly)
# ---------------------------------------------------------------------------

def reference_forward(x, weights1, weights2, conv_w, conv_b, modes1, modes2):
    B, C, H, W = x.shape
    x_ft = jnp.fft.rfft2(x)
    out_ft = jnp.zeros((B, C, H, W // 2 + 1), dtype=jnp.complex64)
    out_ft = out_ft.at[:, :, :modes1, :modes2].set(
        jnp.einsum('bixy,ioxy->boxy', x_ft[:, :, :modes1, :modes2], weights1))
    out_ft = out_ft.at[:, :, H - modes1:, :modes2].set(
        jnp.einsum('bixy,ioxy->boxy', x_ft[:, :, H - modes1:, :modes2], weights2))
    x1 = jnp.fft.irfft2(out_ft, s=(H, W)).astype(jnp.float32)
    x2 = jnp.einsum('bihw,oi->bohw', x, conv_w[:, :, 0, 0]) + conv_b[None, :, None, None]
    z = x1 + x2
    return 0.5 * z * (1.0 + jax.scipy.special.erf(z * 0.7071067811865476))


# ---------------------------------------------------------------------------
# Main
# ---------------------------------------------------------------------------

if __name__ == "__main__":
    B, C, H, W = 2, 8, 16, 16       # batch, width (channels), spatial
    modes1, modes2 = 4, 4

    key = jax.random.PRNGKey(0)
    k1, k2, k3, k4, k5, k6, kx = jax.random.split(key, 7)

    scale = 1.0 / (C * C)
    # SpectralConv2d weights: complex, uniform [0,1) real & imag, scaled (like torch.rand cfloat)
    weights1 = (scale * (jax.random.uniform(k1, (C, C, modes1, modes2))
                         + 1j * jax.random.uniform(k2, (C, C, modes1, modes2)))).astype(jnp.complex64)
    weights2 = (scale * (jax.random.uniform(k3, (C, C, modes1, modes2))
                         + 1j * jax.random.uniform(k4, (C, C, modes1, modes2)))).astype(jnp.complex64)

    # nn.Conv2d(width, width, 1) parameters
    conv_w = (jax.random.uniform(k5, (C, C, 1, 1), minval=-0.3, maxval=0.3)).astype(jnp.float32)
    conv_b = (jax.random.uniform(k6, (C,), minval=-0.3, maxval=0.3)).astype(jnp.float32)

    x = jax.random.normal(kx, (B, C, H, W), dtype=jnp.float32)

    out = fno_block_forward(x, weights1, weights2, conv_w, conv_b, modes1, modes2)
    out = jax.block_until_ready(out)

    ref = reference_forward(x, weights1, weights2, conv_w, conv_b, modes1, modes2)
    ref = jax.block_until_ready(ref)

    assert out.shape == (B, C, H, W), out.shape
    assert jnp.allclose(out, ref, atol=1e-4, rtol=1e-4), float(jnp.max(jnp.abs(out - ref)))

    print("KERNEL_OK")
</pallas_src>

<mosaic_0001>
module attributes {stable_mosaic.version = 11 : i64} {
  func.func @_spectral_mix_kernel(%arg0: i32, %arg1: i32, %arg2: memref<1x16x32xf32, #tpu.memory_space<vmem>>, %arg3: memref<16x16x32xf32, #tpu.memory_space<vmem>>, %arg4: memref<1x16x32xf32, #tpu.memory_space<vmem>>) attributes {dimension_semantics = [#tpu.dimension_semantics<parallel>, #tpu.dimension_semantics<parallel>], iteration_bounds = array<i64: 1, 2>, scalar_prefetch = 0 : i64, scratch_operands = 0 : i64, tpu.core_type = #tpu.core_type<tc>, window_params = [{transform_indices = @transform_0, window_bounds = array<i64: 1, 16, 32>}, {transform_indices = @transform_1, window_bounds = array<i64: 16, 16, 32>}, {transform_indices = @transform_2, window_bounds = array<i64: 1, 16, 32>}]} {
    %c0 = arith.constant 0 : index
    %c0_0 = arith.constant 0 : index
    %c0_1 = arith.constant 0 : index
    %0 = vector.load %arg2[%c0, %c0_0, %c0_1] : memref<1x16x32xf32, #tpu.memory_space<vmem>>, vector<1x16x32xf32>
    %1 = vector.shape_cast %0 : vector<1x16x32xf32> to vector<16x32xf32>
    %2 = vector.extract_strided_slice %1 {offsets = [0, 0], sizes = [1, 32], strides = [1, 1]} : vector<16x32xf32> to vector<1x32xf32>
    %c0_2 = arith.constant 0 : index
    %c0_3 = arith.constant 0 : index
    %c0_4 = arith.constant 0 : index
    %3 = vector.load %arg3[%c0_2, %c0_3, %c0_4] : memref<16x16x32xf32, #tpu.memory_space<vmem>>, vector<1x16x32xf32>
    %4 = vector.shape_cast %3 : vector<1x16x32xf32> to vector<16x32xf32>
    %5 = vector.broadcast %2 : vector<1x32xf32> to vector<16x32xf32>
    %6 = arith.mulf %5, %4 : vector<16x32xf32>
    %7 = vector.extract_strided_slice %1 {offsets = [1, 0], sizes = [1, 32], strides = [1, 1]} : vector<16x32xf32> to vector<1x32xf32>
    %c1 = arith.constant 1 : index
    %c0_5 = arith.constant 0 : index
    %c0_6 = arith.constant 0 : index
    %8 = vector.load %arg3[%c1, %c0_5, %c0_6] : memref<16x16x32xf32, #tpu.memory_space<vmem>>, vector<1x16x32xf32>
    %9 = vector.shape_cast %8 : vector<1x16x32xf32> to vector<16x32xf32>
    %10 = vector.broadcast %7 : vector<1x32xf32> to vector<16x32xf32>
    %11 = arith.mulf %10, %9 : vector<16x32xf32>
    %12 = arith.addf %6, %11 : vector<16x32xf32>
    %13 = vector.extract_strided_slice %1 {offsets = [2, 0], sizes = [1, 32], strides = [1, 1]} : vector<16x32xf32> to vector<1x32xf32>
    %c2 = arith.constant 2 : index
    %c0_7 = arith.constant 0 : index
    %c0_8 = arith.constant 0 : index
    %14 = vector.load %arg3[%c2, %c0_7, %c0_8] : memref<16x16x32xf32, #tpu.memory_space<vmem>>, vector<1x16x32xf32>
    %15 = vector.shape_cast %14 : vector<1x16x32xf32> to vector<16x32xf32>
    %16 = vector.broadcast %13 : vector<1x32xf32> to vector<16x32xf32>
    %17 = arith.mulf %16, %15 : vector<16x32xf32>
    %18 = arith.addf %12, %17 : vector<16x32xf32>
    %19 = vector.extract_strided_slice %1 {offsets = [3, 0], sizes = [1, 32], strides = [1, 1]} : vector<16x32xf32> to vector<1x32xf32>
    %c3 = arith.constant 3 : index
    %c0_9 = arith.constant 0 : index
    %c0_10 = arith.constant 0 : index
    %20 = vector.load %arg3[%c3, %c0_9, %c0_10] : memref<16x16x32xf32, #tpu.memory_space<vmem>>, vector<1x16x32xf32>
    %21 = vector.shape_cast %20 : vector<1x16x32xf32> to vector<16x32xf32>
    %22 = vector.broadcast %19 : vector<1x32xf32> to vector<16x32xf32>
    %23 = arith.mulf %22, %21 : vector<16x32xf32>
    %24 = arith.addf %18, %23 : vector<16x32xf32>
    %25 = vector.extract_strided_slice %1 {offsets = [4, 0], sizes = [1, 32], strides = [1, 1]} : vector<16x32xf32> to vector<1x32xf32>
    %c4 = arith.constant 4 : index
    %c0_11 = arith.constant 0 : index
    %c0_12 = arith.constant 0 : index
    %26 = vector.load %arg3[%c4, %c0_11, %c0_12] : memref<16x16x32xf32, #tpu.memory_space<vmem>>, vector<1x16x32xf32>
    %27 = vector.shape_cast %26 : vector<1x16x32xf32> to vector<16x32xf32>
    %28 = vector.broadcast %25 : vector<1x32xf32> to vector<16x32xf32>
    %29 = arith.mulf %28, %27 : vector<16x32xf32>
    %30 = arith.addf %24, %29 : vector<16x32xf32>
    %31 = vector.extract_strided_slice %1 {offsets = [5, 0], sizes = [1, 32], strides = [1, 1]} : vector<16x32xf32> to vector<1x32xf32>
    %c5 = arith.constant 5 : index
    %c0_13 = arith.constant 0 : index
    %c0_14 = arith.constant 0 : index
    %32 = vector.load %arg3[%c5, %c0_13, %c0_14] : memref<16x16x32xf32, #tpu.memory_space<vmem>>, vector<1x16x32xf32>
    %33 = vector.shape_cast %32 : vector<1x16x32xf32> to vector<16x32xf32>
    %34 = vector.broadcast %31 : vector<1x32xf32> to vector<16x32xf32>
    %35 = arith.mulf %34, %33 : vector<16x32xf32>
    %36 = arith.addf %30, %35 : vector<16x32xf32>
    %37 = vector.extract_strided_slice %1 {offsets = [6, 0], sizes = [1, 32], strides = [1, 1]} : vector<16x32xf32> to vector<1x32xf32>
    %c6 = arith.constant 6 : index
    %c0_15 = arith.constant 0 : index
    %c0_16 = arith.constant 0 : index
    %38 = vector.load %arg3[%c6, %c0_15, %c0_16] : memref<16x16x32xf32, #tpu.memory_space<vmem>>, vector<1x16x32xf32>
    %39 = vector.shape_cast %38 : vector<1x16x32xf32> to vector<16x32xf32>
    %40 = vector.broadcast %37 : vector<1x32xf32> to vector<16x32xf32>
    %41 = arith.mulf %40, %39 : vector<16x32xf32>
    %42 = arith.addf %36, %41 : vector<16x32xf32>
    %43 = vector.extract_strided_slice %1 {offsets = [7, 0], sizes = [1, 32], strides = [1, 1]} : vector<16x32xf32> to vector<1x32xf32>
    %c7 = arith.constant 7 : index
    %c0_17 = arith.constant 0 : index
    %c0_18 = arith.constant 0 : index
    %44 = vector.load %arg3[%c7, %c0_17, %c0_18] : memref<16x16x32xf32, #tpu.memory_space<vmem>>, vector<1x16x32xf32>
    %45 = vector.shape_cast %44 : vector<1x16x32xf32> to vector<16x32xf32>
    %46 = vector.broadcast %43 : vector<1x32xf32> to vector<16x32xf32>
    %47 = arith.mulf %46, %45 : vector<16x32xf32>
    %48 = arith.addf %42, %47 : vector<16x32xf32>
    %49 = vector.extract_strided_slice %1 {offsets = [8, 0], sizes = [1, 32], strides = [1, 1]} : vector<16x32xf32> to vector<1x32xf32>
    %c8 = arith.constant 8 : index
    %c0_19 = arith.constant 0 : index
    %c0_20 = arith.constant 0 : index
    %50 = vector.load %arg3[%c8, %c0_19, %c0_20] : memref<16x16x32xf32, #tpu.memory_space<vmem>>, vector<1x16x32xf32>
    %51 = vector.shape_cast %50 : vector<1x16x32xf32> to vector<16x32xf32>
    %52 = vector.broadcast %49 : vector<1x32xf32> to vector<16x32xf32>
    %53 = arith.mulf %52, %51 : vector<16x32xf32>
    %54 = arith.addf %48, %53 : vector<16x32xf32>
    %55 = vector.extract_strided_slice %1 {offsets = [9, 0], sizes = [1, 32], strides = [1, 1]} : vector<16x32xf32> to vector<1x32xf32>
    %c9 = arith.constant 9 : index
    %c0_21 = arith.constant 0 : index
    %c0_22 = arith.constant 0 : index
    %56 = vector.load %arg3[%c9, %c0_21, %c0_22] : memref<16x16x32xf32, #tpu.memory_space<vmem>>, vector<1x16x32xf32>
    %57 = vector.shape_cast %56 : vector<1x16x32xf32> to vector<16x32xf32>
    %58 = vector.broadcast %55 : vector<1x32xf32> to vector<16x32xf32>
    %59 = arith.mulf %58, %57 : vector<16x32xf32>
    %60 = arith.addf %54, %59 : vector<16x32xf32>
    %61 = vector.extract_strided_slice %1 {offsets = [10, 0], sizes = [1, 32], strides = [1, 1]} : vector<16x32xf32> to vector<1x32xf32>
    %c10 = arith.constant 10 : index
    %c0_23 = arith.constant 0 : index
    %c0_24 = arith.constant 0 : index
    %62 = vector.load %arg3[%c10, %c0_23, %c0_24] : memref<16x16x32xf32, #tpu.memory_space<vmem>>, vector<1x16x32xf32>
    %63 = vector.shape_cast %62 : vector<1x16x32xf32> to vector<16x32xf32>
    %64 = vector.broadcast %61 : vector<1x32xf32> to vector<16x32xf32>
    %65 = arith.mulf %64, %63 : vector<16x32xf32>
    %66 = arith.addf %60, %65 : vector<16x32xf32>
    %67 = vector.extract_strided_slice %1 {offsets = [11, 0], sizes = [1, 32], strides = [1, 1]} : vector<16x32xf32> to vector<1x32xf32>
    %c11 = arith.constant 11 : index
    %c0_25 = arith.constant 0 : index
    %c0_26 = arith.constant 0 : index
    %68 = vector.load %arg3[%c11, %c0_25, %c0_26] : memref<16x16x32xf32, #tpu.memory_space<vmem>>, vector<1x16x32xf32>
    %69 = vector.shape_cast %68 : vector<1x16x32xf32> to vector<16x32xf32>
    %70 = vector.broadcast %67 : vector<1x32xf32> to vector<16x32xf32>
    %71 = arith.mulf %70, %69 : vector<16x32xf32>
    %72 = arith.addf %66, %71 : vector<16x32xf32>
    %73 = vector.extract_strided_slice %1 {offsets = [12, 0], sizes = [1, 32], strides = [1, 1]} : vector<16x32xf32> to vector<1x32xf32>
    %c12 = arith.constant 12 : index
    %c0_27 = arith.constant 0 : index
    %c0_28 = arith.constant 0 : index
    %74 = vector.load %arg3[%c12, %c0_27, %c0_28] : memref<16x16x32xf32, #tpu.memory_space<vmem>>, vector<1x16x32xf32>
    %75 = vector.shape_cast %74 : vector<1x16x32xf32> to vector<16x32xf32>
    %76 = vector.broadcast %73 : vector<1x32xf32> to vector<16x32xf32>
    %77 = arith.mulf %76, %75 : vector<16x32xf32>
    %78 = arith.addf %72, %77 : vector<16x32xf32>
    %79 = vector.extract_strided_slice %1 {offsets = [13, 0], sizes = [1, 32], strides = [1, 1]} : vector<16x32xf32> to vector<1x32xf32>
    %c13 = arith.constant 13 : index
    %c0_29 = arith.constant 0 : index
    %c0_30 = arith.constant 0 : index
    %80 = vector.load %arg3[%c13, %c0_29, %c0_30] : memref<16x16x32xf32, #tpu.memory_space<vmem>>, vector<1x16x32xf32>
    %81 = vector.shape_cast %80 : vector<1x16x32xf32> to vector<16x32xf32>
    %82 = vector.broadcast %79 : vector<1x32xf32> to vector<16x32xf32>
    %83 = arith.mulf %82, %81 : vector<16x32xf32>
    %84 = arith.addf %78, %83 : vector<16x32xf32>
    %85 = vector.extract_strided_slice %1 {offsets = [14, 0], sizes = [1, 32], strides = [1, 1]} : vector<16x32xf32> to vector<1x32xf32>
    %c14 = arith.constant 14 : index
    %c0_31 = arith.constant 0 : index
    %c0_32 = arith.constant 0 : index
    %86 = vector.load %arg3[%c14, %c0_31, %c0_32] : memref<16x16x32xf32, #tpu.memory_space<vmem>>, vector<1x16x32xf32>
    %87 = vector.shape_cast %86 : vector<1x16x32xf32> to vector<16x32xf32>
    %88 = vector.broadcast %85 : vector<1x32xf32> to vector<16x32xf32>
    %89 = arith.mulf %88, %87 : vector<16x32xf32>
    %90 = arith.addf %84, %89 : vector<16x32xf32>
    %91 = vector.extract_strided_slice %1 {offsets = [15, 0], sizes = [1, 32], strides = [1, 1]} : vector<16x32xf32> to vector<1x32xf32>
    %c15 = arith.constant 15 : index
    %c0_33 = arith.constant 0 : index
    %c0_34 = arith.constant 0 : index
    %92 = vector.load %arg3[%c15, %c0_33, %c0_34] : memref<16x16x32xf32, #tpu.memory_space<vmem>>, vector<1x16x32xf32>
    %93 = vector.shape_cast %92 : vector<1x16x32xf32> to vector<16x32xf32>
    %94 = vector.broadcast %91 : vector<1x32xf32> to vector<16x32xf32>
    %95 = arith.mulf %94, %93 : vector<16x32xf32>
    %96 = arith.addf %90, %95 : vector<16x32xf32>
    %c0_35 = arith.constant 0 : index
    %c0_36 = arith.constant 0 : index
    %c0_37 = arith.constant 0 : index
    %97 = vector.load %arg4[%c0_35, %c0_36, %c0_37] : memref<1x16x32xf32, #tpu.memory_space<vmem>>, vector<1x16x32xf32>
    %98 = vector.shape_cast %97 : vector<1x16x32xf32> to vector<16x32xf32>
    %99 = vector.shape_cast %96 : vector<16x32xf32> to vector<1x16x32xf32>
    tpu.vector_store %arg4[%c0_35, %c0_36, %c0_37], %99 {strides = array<i32>} : memref<1x16x32xf32, #tpu.memory_space<vmem>>, vector<1x16x32xf32>,
    return
  }
  func.func @transform_0(%arg0: i32, %arg1: i32) -> (i32, i32, i32) {
    %c0_i32 = arith.constant 0 : i32
    %c0_i32_0 = arith.constant 0 : i32
    return %arg1, %c0_i32, %arg0 : i32, i32, i32
  }
  func.func @transform_1(%arg0: i32, %arg1: i32) -> (i32, i32, i32) {
    %c0_i32 = arith.constant 0 : i32
    %c0_i32_0 = arith.constant 0 : i32
    %c0_i32_1 = arith.constant 0 : i32
    return %c0_i32, %c0_i32_0, %arg0 : i32, i32, i32
  }
  func.func @transform_2(%arg0: i32, %arg1: i32) -> (i32, i32, i32) {
    %c0_i32 = arith.constant 0 : i32
    %c0_i32_0 = arith.constant 0 : i32
    return %arg1, %c0_i32, %arg0 : i32, i32, i32
  }
}

</mosaic_0001>

<llo_original>
// kernel: tpu_custom_call.1
$region0: #{tpu_custom_call.1}
  #allocation0 [shape = 'u32[]', space=smem, size = 0x4, offset = 0x4, fixed_abs, tag = 'smem constant byte address 0x4 - core index']
  #allocation1 [shape = 'u32[144,128]{1,0:T(1,128)}', space=vmem, size = 0x12000, scoped, tag = 'internal scratch']
  %s0 = inlined_call_operand.hbm [shape: f32[2,16,32], index: 0, kind: input, shape index: {}]
  %s1 = inlined_call_operand.hbm [shape: f32[16,16,32], index: 1, kind: input, shape index: {}]
  %s2 = inlined_call_operand.hbm [shape: f32[2,16,32], index: 2, kind: output, shape index: {}]
  %s3 = sld [smem:[#allocation0]]
  $region49: #{tpu_custom_call.1} parent=0
    _
  %s5 = ssub.s32 1, %s3
  %s6 = scalar_select 0, %s5, %s3
  $region1: #{tpu_custom_call.1} parent=0
    #allocation2 [shape = 'u8[16384]{0}', space=vmem, size = 0x4000, scoped, tag = 'input window, operand 0']
    #allocation3 [shape = 's32[2]{0}', space=sflag, size = 0x8, scoped, tag = 'scoped memory for tpu_custom_call.1']
    #allocation4 [shape = 's32[2]{0}', space=sflag, size = 0x8, scoped, tag = 'scoped memory for tpu_custom_call.1']
    #allocation5 [shape = 'u8[131072]{0}', space=vmem, size = 0x20000, scoped, tag = 'input window, operand 1, single buffered']
    #allocation6 [shape = 's32[1]{0}', space=sflag, size = 0x4, scoped, tag = 'scoped memory for tpu_custom_call.1']
    #allocation7 [shape = 'u8[16384]{0}', space=vmem, size = 0x4000, scoped, tag = 'output window, operand 0']
    %7 = vsyncpa [#allocation3], 0
    %s8 = scalar_lea.sflag [#allocation3], 1
    %9 = vsyncpa %s8, 0
    %10 = vsyncpa [#allocation6], 0
    %11 = vsyncpa [#allocation4], 0
    %s12 = scalar_lea.sflag [#allocation4], 1
    %13 = vsyncpa %s12, 0
    loop: start=0, step=1, limit=4
    $region2: #{tpu_custom_call.1} parent=1 // loop_pre_header
      _
    $region3: #{tpu_custom_call.1} parent=1 // loop_header
      %s15 = sphi 0, %s19
      %p16 = scmp.ge.s32.totalorder %s15, 4
      %s22 = sphi 0, %s34
      %s23 = sphi 0, %s30
      %s24 = sphi 0, %s22
      %s25 = sphi 0, %s23
      %s26 = sphi 0, %s24
      %s27 = sphi 0, %s25
      %s39 = sphi 0, %s41
      %s42 = sphi 0, %s39
      %s43 = sphi 0, %s42
      %s59 = sphi 0, %s43
      %s65 = sphi 0, %s67
      %s68 = sphi 0, %s65
      %s69 = sphi 0, %s68
      %s85 = sphi 0, %s69
      %s93 = sphi 0, %s95
      %s96 = sphi 0, %s93
      %s97 = sphi 0, %s96
      %s113 = sphi 0, %s97
    $region4: #{tpu_custom_call.1} parent=1 // loop_header_branch
      %18 = sbr.rel (%p16) target = $region8
    $region5: #{tpu_custom_call.1} parent=1 // loop_body
      %s20 = ssub.s32 %s15, 1
      %s21 = ssub.s32 %s15, 2
      %s28 = sadd.s32 1, %s23
      %p29 = scmp.ge.s32.totalorder %s28, 2
      %s30 = scalar_select %p29, 0, %s28
      %s31 = sadd.s32 1, %s22
      %s32 = scalar_select %p29, %s31, %s22
      %p33 = scmp.ge.s32.totalorder %s32, 1
      %s34 = scalar_select %p33, 0, %s32
      %s35 = ssub.s32 %s23, %s30
      %s36 = ssub.s32 %s22, %s34
      %s37 = sor.u32 %s35, %s36
      %p38 = scmp.eq.s32.totalorder %s37, 0
      %s40 = sadd.s32 %s39, 1
      %s41 = scalar_select %p38, %s39, %s40
      %p44 = pneg %p38
      %p45 = scmp.eq.s32.totalorder %s15, 1
      %p46 = por %p44, %p45
      %p47 = scmp.ne.s32.totalorder %s39, %s42
      %p48 = scmp.eq.s32.totalorder %s15, 0
      %p49 = por %p47, %p48
      %p50 = scmp.ne.s32.totalorder %s39, %s42
      %p51 = scmp.eq.s32.totalorder %s20, 1
      %p52 = por %p50, %p51
      %p53 = scmp.ne.s32.totalorder %s42, %s43
      %p54 = scmp.eq.s32.totalorder %s20, 0
      %p55 = por %p53, %p54
      %p56 = scmp.ne.s32.totalorder %s42, %s43
      %p57 = scmp.eq.s32.totalorder %s21, 1
      %p58 = por %p56, %p57
      %p60 = scmp.ne.s32.totalorder %s43, %s59
      %p61 = scmp.eq.s32.totalorder %s21, 0
      %p62 = por %p60, %p61
      %s63 = ssub.s32 %s22, %s34
      %p64 = scmp.eq.s32.totalorder %s63, 0
      %s66 = sadd.s32 %s65, 1
      %s67 = scalar_select %p64, %s65, %s66
      %p70 = pneg %p64
      %p71 = scmp.eq.s32.totalorder %s15, 1
      %p72 = por %p70, %p71
      %p73 = scmp.ne.s32.totalorder %s65, %s68
      %p74 = scmp.eq.s32.totalorder %s15, 0
      %p75 = por %p73, %p74
      %p76 = scmp.ne.s32.totalorder %s65, %s68
      %p77 = scmp.eq.s32.totalorder %s20, 1
      %p78 = por %p76, %p77
      %p79 = scmp.ne.s32.totalorder %s68, %s69
      %p80 = scmp.eq.s32.totalorder %s20, 0
      %p81 = por %p79, %p80
      %p82 = scmp.ne.s32.totalorder %s68, %s69
      %p83 = scmp.eq.s32.totalorder %s21, 1
      %p84 = por %p82, %p83
      %p86 = scmp.ne.s32.totalorder %s69, %s85
      %p87 = scmp.eq.s32.totalorder %s21, 0
      %p88 = por %p86, %p87
      %s89 = ssub.s32 %s23, %s30
      %s90 = ssub.s32 %s22, %s34
      %s91 = sor.u32 %s89, %s90
      %p92 = scmp.eq.s32.totalorder %s91, 0
      %s94 = sadd.s32 %s93, 1
      %s95 = scalar_select %p92, %s93, %s94
      %p98 = pneg %p92
      %p99 = scmp.eq.s32.totalorder %s15, 1
      %p100 = por %p98, %p99
      %p101 = scmp.ne.s32.totalorder %s93, %s96
      %p102 = scmp.eq.s32.totalorder %s15, 0
      %p103 = por %p101, %p102
      %p104 = scmp.ne.s32.totalorder %s93, %s96
      %p105 = scmp.eq.s32.totalorder %s20, 1
      %p106 = por %p104, %p105
      %p107 = scmp.ne.s32.totalorder %s96, %s97
      %p108 = scmp.eq.s32.totalorder %s20, 0
      %p109 = por %p107, %p108
      %p110 = scmp.ne.s32.totalorder %s96, %s97
      %p111 = scmp.eq.s32.totalorder %s21, 1
      %p112 = por %p110, %p111
      %p114 = scmp.ne.s32.totalorder %s97, %s113
      %p115 = scmp.eq.s32.totalorder %s21, 0
      %p116 = por %p114, %p115
      %p117 = scmp.le.s32.totalorder 1, %s15
      %p118 = scmp.lt.s32.totalorder %s15, 3
      %p119 = pnand %p117, %p118
      %p120 = pneg %p119
      // Predicated region
      $region9: #{tpu_custom_call.1} parent=5 // pred_check
        _
      $region10: #{tpu_custom_call.1} parent=5 // pred_check_branch
        %122 = sbr.rel (%p119) target = $region12
      $region11: #{tpu_custom_call.1} parent=5 // pred_region
        %s123 = ssub.s32 %s15, 1
        // Predicated region
        $region13: #{tpu_custom_call.1} parent=11 // pred_check
          %p124 = pneg %p81
        $region14: #{tpu_custom_call.1} parent=11 // pred_check_branch
          %126 = sbr.rel (%p124) target = $region16
        $region15: #{tpu_custom_call.1} parent=11 // pred_region
          %s128 = ssub.s32 4096, 4096
          %129 = vsyncadd [#allocation6], %s128
          %s130 = smul.addr %s24, 128
          %s131 = scalar_lea.hbm %s1, %s130
          %s132 = sshll.u32 [#allocation5], 4
          %s133 = int_to_ptr.vmem [resolvable:$true] %s132
          %138 = dma.hbm_to_vmem [thread:$0]  %s131, 4096, %s133, [#allocation6], 128, 128, 8
        $region16: #{tpu_custom_call.1} parent=11 // pred_fallthru
          _
      $region12: #{tpu_custom_call.1} parent=5 // pred_fallthru
        _
      %p139 = scmp.lt.s32.totalorder %s15, 2
      // Predicated region
      $region17: #{tpu_custom_call.1} parent=5 // pred_check
        %p140 = pneg %p139
      $region18: #{tpu_custom_call.1} parent=5 // pred_check_branch
        %142 = sbr.rel (%p140) target = $region20
      $region19: #{tpu_custom_call.1} parent=5 // pred_region
        // Predicated region
        $region21: #{tpu_custom_call.1} parent=19 // pred_check
          %p143 = pneg %p49
        $region22: #{tpu_custom_call.1} parent=19 // pred_check_branch
          %145 = sbr.rel (%p143) target = $region24
        $region23: #{tpu_custom_call.1} parent=19 // pred_region
          %s146 = sand.u32 %s39, 1
          %s147 = scalar_lea.sflag [#allocation3], %s146
          %s148 = sand.u32 %s39, 1
          %s149 = smul.addr %s148, 16
          %s150 = scalar_lea.vmem [#allocation2], %s149
          %s152 = ssub.s32 256, 256
          %153 = vsyncadd %s147, %s152
          %s154 = smul.addr %s23, 2
          %s155 = sadd.s32 %s22, %s154
          %s156 = smul.addr %s155, 128
          %s157 = scalar_lea.hbm %s0, %s156
          %s158 = sshll.u32 %s150, 4
          %s159 = int_to_ptr.vmem [resolvable:$true] %s158
          %164 = dma.hbm_to_vmem [thread:$0]  %s157, 256, %s159, %s147, 128, 128, 8
        $region24: #{tpu_custom_call.1} parent=19 // pred_fallthru
          _
      $region20: #{tpu_custom_call.1} parent=5 // pred_fallthru
        _
      %p165 = scmp.le.s32.totalorder 1, %s15
      %p166 = scmp.lt.s32.totalorder %s15, 3
      %p167 = pnand %p165, %p166
      %p168 = pneg %p167
      // Predicated region
      $region25: #{tpu_custom_call.1} parent=5 // pred_check
        _
      $region26: #{tpu_custom_call.1} parent=5 // pred_check_branch
        %170 = sbr.rel (%p167) target = $region28
      $region27: #{tpu_custom_call.1} parent=5 // pred_region
        %s171 = ssub.s32 %s15, 1
        %s172 = sand.u32 %s42, 1
        %s173 = scalar_lea.sflag [#allocation3], %s172
        %s174 = sand.u32 %s42, 1
        %s175 = smul.addr %s174, 16
        %s176 = scalar_lea.vmem [#allocation2], %s175
        // Predicated region
        $region29: #{tpu_custom_call.1} parent=27 // pred_check
          %p177 = pneg %p55
        $region30: #{tpu_custom_call.1} parent=27 // pred_check_branch
          %179 = sbr.rel (%p177) target = $region32
        $region31: #{tpu_custom_call.1} parent=27 // pred_region
          %180 = dma.done %s173, 256
        $region32: #{tpu_custom_call.1} parent=27 // pred_fallthru
          _
        // Predicated region
        $region33: #{tpu_custom_call.1} parent=27 // pred_check
          %p181 = pneg %p81
        $region34: #{tpu_custom_call.1} parent=27 // pred_check_branch
          %183 = sbr.rel (%p181) target = $region36
        $region35: #{tpu_custom_call.1} parent=27 // pred_region
          %184 = dma.done [#allocation6], 4096
        $region36: #{tpu_custom_call.1} parent=27 // pred_fallthru
          _
        %s185 = sand.u32 %s42, 1
        %s186 = scalar_lea.sflag [#allocation3], %s185
        %s187 = sand.u32 %s42, 1
        %s188 = smul.addr %s187, 16
        %s189 = scalar_lea.vmem [#allocation2], %s188
        %p190 = pneg %p55
        %p191 = pneg %p52
        %p192 = pneg %p81
        %p193 = pneg %p78
        %p194 = pneg %p109
        %p195 = pneg %p106
        %s196 = sand.u32 %s96, 1
        %s197 = scalar_lea.sflag [#allocation4], %s196
        %s198 = sand.u32 %s96, 1
        %s199 = smul.addr %s198, 16
        %s200 = scalar_lea.vmem [#allocation7], %s199
        %v201 = vld [vmem:[%s176] sm:$0xff]
        %v202 = vld [vmem:[%s176 + $0x8] sm:$0xff]
        %v203 = vld [vmem:[#allocation5] sm:$0xff]
        %v204 = vld [vmem:[#allocation5 + $0x8] sm:$0xff]
        %v205 = vlaneseq
        %v206 = vshrl.u32 %v205, 7
        %v207 = vsub.s32 0, %v206
        %v208 = vrot.slane %v201, %v207
        %v209 = vmul.f32 %v208, %v203
        %v210 = vmul.f32 %v208, %v204
        %s211 = scalar_lea.vmem [#allocation5], 16
        %v212 = vld [vmem:[%s211] sm:$0xff]
        %v213 = vld [vmem:[%s211 + $0x8] sm:$0xff]
        %v214 = vlaneseq
        %v215 = vshrl.u32 %v214, 7
        %v216 = vsub.s32 1, %v215
        %v217 = vrot.slane %v201, %v216
        %v218 = vmul.f32 %v217, %v212
        %v219 = vmul.f32 %v217, %v213
        %v220 = vadd.f32 %v209, %v218
        %v221 = vadd.f32 %v210, %v219
        %s222 = scalar_lea.vmem [#allocation5], 32
        %v223 = vld [vmem:[%s222] sm:$0xff]
        %v224 = vld [vmem:[%s222 + $0x8] sm:$0xff]
        %v225 = vlaneseq
        %v226 = vshrl.u32 %v225, 7
        %v227 = vsub.s32 2, %v226
        %v228 = vrot.slane %v201, %v227
        %v229 = vmul.f32 %v228, %v223
        %v230 = vmul.f32 %v228, %v224
        %v231 = vadd.f32 %v220, %v229
        %v232 = vadd.f32 %v221, %v230
        %s233 = scalar_lea.vmem [#allocation5], 48
        %v234 = vld [vmem:[%s233] sm:$0xff]
        %v235 = vld [vmem:[%s233 + $0x8] sm:$0xff]
        %v236 = vlaneseq
        %v237 = vshrl.u32 %v236, 7
        %v238 = vsub.s32 3, %v237
        %v239 = vrot.slane %v201, %v238
        %v240 = vmul.f32 %v239, %v234
        %v241 = vmul.f32 %v239, %v235
        %v242 = vadd.f32 %v231, %v240
        %v243 = vadd.f32 %v232, %v241
        %s244 = scalar_lea.vmem [#allocation5], 64
        %v245 = vld [vmem:[%s244] sm:$0xff]
        %v246 = vld [vmem:[%s244 + $0x8] sm:$0xff]
        %v247 = vlaneseq
        %v248 = vshrl.u32 %v247, 7
        %v249 = vsub.s32 4, %v248
        %v250 = vrot.slane %v201, %v249
        %v251 = vmul.f32 %v250, %v245
        %v252 = vmul.f32 %v250, %v246
        %v253 = vadd.f32 %v242, %v251
        %v254 = vadd.f32 %v243, %v252
        %s255 = scalar_lea.vmem [#allocation5], 80
        %v256 = vld [vmem:[%s255] sm:$0xff]
        %v257 = vld [vmem:[%s255 + $0x8] sm:$0xff]
        %v258 = vlaneseq
        %v259 = vshrl.u32 %v258, 7
        %v260 = vsub.s32 5, %v259
        %v261 = vrot.slane %v201, %v260
        %v262 = vmul.f32 %v261, %v256
        %v263 = vmul.f32 %v261, %v257
        %v264 = vadd.f32 %v253, %v262
        %v265 = vadd.f32 %v254, %v263
        %s266 = scalar_lea.vmem [#allocation5], 96
        %v267 = vld [vmem:[%s266] sm:$0xff]
        %v268 = vld [vmem:[%s266 + $0x8] sm:$0xff]
        %v269 = vlaneseq
        %v270 = vshrl.u32 %v269, 7
        %v271 = vsub.s32 6, %v270
        %v272 = vrot.slane %v201, %v271
        %v273 = vmul.f32 %v272, %v267
        %v274 = vmul.f32 %v272, %v268
        %v275 = vadd.f32 %v264, %v273
        %v276 = vadd.f32 %v265, %v274
        %s277 = scalar_lea.vmem [#allocation5], 112
        %v278 = vld [vmem:[%s277] sm:$0xff]
        %v279 = vld [vmem:[%s277 + $0x8] sm:$0xff]
        %v280 = vlaneseq
        %v281 = vshrl.u32 %v280, 7
        %v282 = vsub.s32 7, %v281
        %v283 = vrot.slane %v201, %v282
        %v284 = vmul.f32 %v283, %v278
        %v285 = vmul.f32 %v283, %v279
        %v286 = vadd.f32 %v275, %v284
        %v287 = vadd.f32 %v276, %v285
        %s288 = scalar_lea.vmem [#allocation5], 128
        %v289 = vld [vmem:[%s288] sm:$0xff]
        %v290 = vld [vmem:[%s288 + $0x8] sm:$0xff]
        %v291 = vlaneseq
        %v292 = vshrl.u32 %v291, 7
        %v293 = vsub.s32 0, %v292
        %v294 = vrot.slane %v202, %v293
        %v295 = vmul.f32 %v294, %v289
        %v296 = vmul.f32 %v294, %v290
        %v297 = vadd.f32 %v286, %v295
        %v298 = vadd.f32 %v287, %v296
        %s299 = scalar_lea.vmem [#allocation5], 144
        %v300 = vld [vmem:[%s299] sm:$0xff]
        %v301 = vld [vmem:[%s299 + $0x8] sm:$0xff]
        %v302 = vlaneseq
        %v303 = vshrl.u32 %v302, 7
        %v304 = vsub.s32 1, %v303
        %v305 = vrot.slane %v202, %v304
        %v306 = vmul.f32 %v305, %v300
        %v307 = vmul.f32 %v305, %v301
        %v308 = vadd.f32 %v297, %v306
        %v309 = vadd.f32 %v298, %v307
        %s310 = scalar_lea.vmem [#allocation5], 160
        %v311 = vld [vmem:[%s310] sm:$0xff]
        %v312 = vld [vmem:[%s310 + $0x8] sm:$0xff]
        %v313 = vlaneseq
        %v314 = vshrl.u32 %v313, 7
        %v315 = vsub.s32 2, %v314
        %v316 = vrot.slane %v202, %v315
        %v317 = vmul.f32 %v316, %v311
        %v318 = vmul.f32 %v316, %v312
        %v319 = vadd.f32 %v308, %v317
        %v320 = vadd.f32 %v309, %v318
        %s321 = scalar_lea.vmem [#allocation5], 176
        %v322 = vld [vmem:[%s321] sm:$0xff]
        %v323 = vld [vmem:[%s321 + $0x8] sm:$0xff]
        %v324 = vlaneseq
        %v325 = vshrl.u32 %v324, 7
        %v326 = vsub.s32 3, %v325
        %v327 = vrot.slane %v202, %v326
        %v328 = vmul.f32 %v327, %v322
        %v329 = vmul.f32 %v327, %v323
        %v330 = vadd.f32 %v319, %v328
        %v331 = vadd.f32 %v320, %v329
        %s332 = scalar_lea.vmem [#allocation5], 192
        %v333 = vld [vmem:[%s332] sm:$0xff]
        %v334 = vld [vmem:[%s332 + $0x8] sm:$0xff]
        %v335 = vlaneseq
        %v336 = vshrl.u32 %v335, 7
        %v337 = vsub.s32 4, %v336
        %v338 = vrot.slane %v202, %v337
        %v339 = vmul.f32 %v338, %v333
        %v340 = vmul.f32 %v338, %v334
        %v341 = vadd.f32 %v330, %v339
        %v342 = vadd.f32 %v331, %v340
        %s343 = scalar_lea.vmem [#allocation5], 208
        %v344 = vld [vmem:[%s343] sm:$0xff]
        %v345 = vld [vmem:[%s343 + $0x8] sm:$0xff]
        %v346 = vlaneseq
        %v347 = vshrl.u32 %v346, 7
        %v348 = vsub.s32 5, %v347
        %v349 = vrot.slane %v202, %v348
        %v350 = vmul.f32 %v349, %v344
        %v351 = vmul.f32 %v349, %v345
        %v352 = vadd.f32 %v341, %v350
        %v353 = vadd.f32 %v342, %v351
        %s354 = scalar_lea.vmem [#allocation5], 224
        %v355 = vld [vmem:[%s354] sm:$0xff]
        %v356 = vld [vmem:[%s354 + $0x8] sm:$0xff]
        %v357 = vlaneseq
        %v358 = vshrl.u32 %v357, 7
        %v359 = vsub.s32 6, %v358
        %v360 = vrot.slane %v202, %v359
        %v361 = vmul.f32 %v360, %v355
        %v362 = vmul.f32 %v360, %v356
        %v363 = vadd.f32 %v352, %v361
        %v364 = vadd.f32 %v353, %v362
        %s365 = scalar_lea.vmem [#allocation5], 240
        %v366 = vld [vmem:[%s365] sm:$0xff]
        %v367 = vld [vmem:[%s365 + $0x8] sm:$0xff]
        %v368 = vlaneseq
        %v369 = vshrl.u32 %v368, 7
        %v370 = vsub.s32 7, %v369
        %v371 = vrot.slane %v202, %v370
        %v372 = vmul.f32 %v371, %v366
        %v373 = vmul.f32 %v371, %v367
        %v374 = vadd.f32 %v363, %v372
        %v375 = vadd.f32 %v364, %v373
        %vm376 = vcmask 261120
        %377 = vst.msk [vmem:[%s200] sm:$0xff] %vm376, %v374
        %378 = vst.msk [vmem:[%s200 + $0x8] sm:$0xff] %vm376, %v375
        %s379 = sand.u32 %s96, 1
        %s380 = scalar_lea.sflag [#allocation4], %s379
        %s381 = sand.u32 %s96, 1
        %s382 = smul.addr %s381, 16
        %s383 = scalar_lea.vmem [#allocation7], %s382
        // Predicated region
        $region37: #{tpu_custom_call.1} parent=27 // pred_check
          %p384 = pneg %p106
        $region38: #{tpu_custom_call.1} parent=27 // pred_check_branch
          %386 = sbr.rel (%p384) target = $region40
        $region39: #{tpu_custom_call.1} parent=27 // pred_region
          %s388 = ssub.s32 256, 256
          %389 = vsyncadd %s380, %s388
          %s390 = smul.addr %s25, 2
          %s391 = sadd.s32 %s24, %s390
          %s392 = smul.addr %s391, 128
          %s393 = scalar_lea.hbm %s2, %s392
          %s394 = sshll.u32 %s383, 4
          %s395 = int_to_ptr.vmem [resolvable:$true] %s394
          %400 = dma.vmem_to_hbm [thread:$0]  %s395, 256, %s393, %s380, 128, 128, 8
        $region40: #{tpu_custom_call.1} parent=27 // pred_fallthru
          _
      $region28: #{tpu_custom_call.1} parent=5 // pred_fallthru
        _
      %p401 = scmp.le.s32.totalorder 2, %s15
      // Predicated region
      $region41: #{tpu_custom_call.1} parent=5 // pred_check
        %p402 = pneg %p401
      $region42: #{tpu_custom_call.1} parent=5 // pred_check_branch
        %404 = sbr.rel (%p402) target = $region44
      $region43: #{tpu_custom_call.1} parent=5 // pred_region
        %s405 = ssub.s32 %s15, 2
        // Predicated region
        $region45: #{tpu_custom_call.1} parent=43 // pred_check
          %p406 = pneg %p112
        $region46: #{tpu_custom_call.1} parent=43 // pred_check_branch
          %408 = sbr.rel (%p406) target = $region48
        $region47: #{tpu_custom_call.1} parent=43 // pred_region
          %s409 = sand.u32 %s97, 1
          %s410 = scalar_lea.sflag [#allocation4], %s409
          %s411 = sand.u32 %s97, 1
          %s412 = smul.addr %s411, 16
          %s413 = scalar_lea.vmem [#allocation7], %s412
          %414 = dma.done %s410, 256
        $region48: #{tpu_custom_call.1} parent=43 // pred_fallthru
          _
      $region44: #{tpu_custom_call.1} parent=5 // pred_fallthru
        _
    $region6: #{tpu_custom_call.1} parent=1 // loop_footer
      %s19 = sadd.s32 1, %s15
    $region7: #{tpu_custom_call.1} parent=1 // loop_footer_branch
      %14 = sbr.rel target = $region3
    $region8: #{tpu_custom_call.1} parent=1 // loop_exit
      _
    %415 = vsyncpa [#allocation3], 1
    %s416 = scalar_lea.sflag [#allocation3], 1
    %417 = vsyncpa %s416, 1
    %418 = vsyncpa [#allocation6], 1
    %419 = vsyncpa [#allocation4], 1
    %s420 = scalar_lea.sflag [#allocation4], 1
    %421 = vsyncpa %s420, 1

</llo_original>
